<compile_context>
chip_gen: v6e
topology: v6e:2x2x1
jax: 0.10.0
libtpu: 0.0.40
codegen_flags: <defaults>
</compile_context>

<pallas_src>
import jax
import jax.numpy as jnp
from jax import lax
from jax.experimental import pallas as pl
from jax.experimental.pallas import tpu as pltpu


def _make_smooth_kernel(tb, h, w, bc, ragged):
    """Builds the kernel with static block/plane shape constants closed over."""

    def kernel(a_ref, b_ref, px_ref, py_ref):
        # a_ref / b_ref: (tb, h, w) block of image planes in native dtype.
        av = a_ref[...].astype(jnp.float32)
        bv = b_ref[...].astype(jnp.float32)
        shape = (tb, h, w)

        # Validity mask for a ragged last block (reads past B*C are undefined
        # DMA padding, so they must be masked out of the sums).
        if ragged:
            i = pl.program_id(0)
            valid = bc - i * tb  # number of real planes in this block
            plane_ok = lax.broadcasted_iota(jnp.int32, shape, 0) < valid
        else:
            plane_ok = None

        # ---- x direction (diff along W), full width via roll-by-(w-1) ----
        # roll(x, shift=w-1, axis=2)[..., i] == x[..., (i+1) % w]  (jnp.roll
        # semantics), so column i holds |x[i] - x[i+1]|; column w-1 is the
        # wrap-around term and gets masked.
        ax = pltpu.roll(av, shift=w - 1, axis=2)
        bx = pltpu.roll(bv, shift=w - 1, axis=2)
        gx1 = jnp.abs(av - ax)
        gx2 = jnp.abs(bv - bx)
        gx = gx1 * jnp.exp(-gx2) + gx2 * jnp.exp(-gx1)
        keep_x = lax.broadcasted_iota(jnp.int32, shape, 2) < (w - 1)
        if plane_ok is not None:
            keep_x = jnp.logical_and(keep_x, plane_ok)
        gx = jnp.where(keep_x, gx, 0.0)
        # Reduce over planes (vreg adds) then H (sublane/XLU); keep lanes.
        px_ref[0] = jnp.sum(jnp.sum(gx, axis=0), axis=0, keepdims=True)  # (1, w)

        # ---- y direction (diff along H), full width via roll-by-(h-1) ----
        ay = pltpu.roll(av, shift=h - 1, axis=1)
        by = pltpu.roll(bv, shift=h - 1, axis=1)
        gy1 = jnp.abs(av - ay)
        gy2 = jnp.abs(bv - by)
        gy = gy1 * jnp.exp(-gy2) + gy2 * jnp.exp(-gy1)
        keep_y = lax.broadcasted_iota(jnp.int32, shape, 1) < (h - 1)
        if plane_ok is not None:
            keep_y = jnp.logical_and(keep_y, plane_ok)
        gy = jnp.where(keep_y, gy, 0.0)
        py_ref[0] = jnp.sum(jnp.sum(gy, axis=0), axis=0, keepdims=True)  # (1, w)

    return kernel


def _pick_tb(bc, tb_target):
    """Pick planes-per-block. Prefer an exact divisor of bc (no ragged tail)."""
    tb_target = max(1, min(bc, tb_target))
    if bc >= 2:
        # Keep at least 2 grid steps so both v7x TensorCores get work.
        tb_target = min(tb_target, -(-bc // 2))
    for tb in range(tb_target, 0, -1):
        if bc % tb == 0 and tb * 2 > tb_target:      # divisor within 2x of target
            return tb, bc // tb, False
    nb = -(-bc // tb_target)
    tb = -(-bc // nb)                                 # rebalance block sizes
    return tb, nb, (nb * tb != bc)


def smooth_loss(img1, img2, *, block_bytes=2 << 20, vmem_limit_bytes=48 << 20):
    """Pallas implementation of SmoothLoss.forward(img1, img2) -> scalar."""
    assert img1.shape == img2.shape, "img1/img2 shape mismatch"
    assert img1.dtype == img2.dtype, "img1/img2 dtype mismatch"
    B, C, H, W = img1.shape
    BC = B * C

    a = img1.reshape(BC, H, W)
    b = img2.reshape(BC, H, W)

    # Size tb from the (8,128)-padded VMEM footprint of one plane, not the
    # logical byte count (small W pads to 128 lanes, small H to 8 sublanes).
    itemsize = jnp.dtype(img1.dtype).itemsize
    padded_plane = (-(-H // 8) * 8) * (-(-W // 128) * 128) * itemsize
    tb, nb, ragged = _pick_tb(BC, block_bytes // max(1, padded_plane))

    kernel = _make_smooth_kernel(tb, H, W, BC, ragged)

    px, py = pl.pallas_call(
        kernel,
        grid=(nb,),
        in_specs=[
            pl.BlockSpec((tb, H, W), lambda i: (i, 0, 0)),
            pl.BlockSpec((tb, H, W), lambda i: (i, 0, 0)),
        ],
        out_specs=(
            pl.BlockSpec((1, 1, W), lambda i: (i, 0, 0)),
            pl.BlockSpec((1, 1, W), lambda i: (i, 0, 0)),
        ),
        out_shape=(
            jax.ShapeDtypeStruct((nb, 1, W), jnp.float32),
            jax.ShapeDtypeStruct((nb, 1, W), jnp.float32),
        ),
        compiler_params=pltpu.CompilerParams(
            dimension_semantics=("parallel",),      # independent blocks
            vmem_limit_bytes=vmem_limit_bytes,      # room for 2x2 input bufs + f32 temps
        ),
    )(a, b)

    # PyTorch .mean() element counts (original, unpadded shape).  Tiny final
    # cross-lane reduction happens here, outside the kernel.
    n_x = BC * H * (W - 1)
    n_y = BC * (H - 1) * W
    total = jnp.float32(0.0)
    if n_x > 0:                                      # guard degenerate W == 1
        total = total + jnp.sum(px) / jnp.float32(n_x)
    if n_y > 0:                                      # guard degenerate H == 1
        total = total + jnp.sum(py) / jnp.float32(n_y)
    return total


def smooth_loss_ref(img1, img2):
    """Pure-JAX reference matching the PyTorch module."""
    gx1 = jnp.abs(img1[:, :, :, :-1] - img1[:, :, :, 1:])
    gy1 = jnp.abs(img1[:, :, :-1, :] - img1[:, :, 1:, :])
    gx2 = jnp.abs(img2[:, :, :, :-1] - img2[:, :, :, 1:])
    gy2 = jnp.abs(img2[:, :, :-1, :] - img2[:, :, 1:, :])
    gx = gx1 * jnp.exp(-gx2) + gx2 * jnp.exp(-gx1)
    gy = gy1 * jnp.exp(-gy2) + gy2 * jnp.exp(-gy1)
    return gx.mean() + gy.mean()


if __name__ == "__main__":
    key = jax.random.PRNGKey(0)
    k1, k2, k3, k4 = jax.random.split(key, 4)
    loss_fn = jax.jit(smooth_loss)

    # Case 1: B*C = 8 planes -> 2 even blocks of 4 (no ragged tail).
    img1 = jax.random.uniform(k1, (2, 4, 16, 16), dtype=jnp.float32)
    img2 = jax.random.uniform(k2, (2, 4, 16, 16), dtype=jnp.float32)
    out = jax.block_until_ready(loss_fn(img1, img2))
    ref = jax.block_until_ready(smooth_loss_ref(img1, img2))
    assert jnp.allclose(out, ref, rtol=1e-5, atol=1e-6), (out, ref)

    # Case 2: B*C = 3 planes -> exercises the in-kernel ragged-tail mask.
    img3 = jax.random.uniform(k3, (1, 3, 16, 16), dtype=jnp.float32)
    img4 = jax.random.uniform(k4, (1, 3, 16, 16), dtype=jnp.float32)
    out2 = jax.block_until_ready(loss_fn(img3, img4))
    ref2 = jax.block_until_ready(smooth_loss_ref(img3, img4))
    assert jnp.allclose(out2, ref2, rtol=1e-5, atol=1e-6), (out2, ref2)

    print("KERNEL_OK")
</pallas_src>

<mosaic_0001>
module attributes {stable_mosaic.version = 11 : i64} {
  func.func @kernel(%arg0: i32, %arg1: memref<4x16x16xf32, #tpu.memory_space<vmem>>, %arg2: memref<4x16x16xf32, #tpu.memory_space<vmem>>, %arg3: memref<1x1x16xf32, #tpu.memory_space<vmem>>, %arg4: memref<1x1x16xf32, #tpu.memory_space<vmem>>) attributes {dimension_semantics = [#tpu.dimension_semantics<parallel>], iteration_bounds = array<i64: 2>, scalar_prefetch = 0 : i64, scratch_operands = 0 : i64, tpu.core_type = #tpu.core_type<tc>, window_params = [{transform_indices = @transform_0, window_bounds = array<i64: 4, 16, 16>}, {transform_indices = @transform_1, window_bounds = array<i64: 4, 16, 16>}, {transform_indices = @transform_2, window_bounds = array<i64: 1, 1, 16>}, {transform_indices = @transform_3, window_bounds = array<i64: 1, 1, 16>}]} {
    %c0 = arith.constant 0 : index
    %c0_0 = arith.constant 0 : index
    %c0_1 = arith.constant 0 : index
    %0 = vector.load %arg1[%c0, %c0_0, %c0_1] : memref<4x16x16xf32, #tpu.memory_space<vmem>>, vector<4x16x16xf32>
    %c0_2 = arith.constant 0 : index
    %c0_3 = arith.constant 0 : index
    %c0_4 = arith.constant 0 : index
    %1 = vector.load %arg2[%c0_2, %c0_3, %c0_4] : memref<4x16x16xf32, #tpu.memory_space<vmem>>, vector<4x16x16xf32>
    %c15_i32 = arith.constant 15 : i32
    %2 = tpu.dynamic_rotate %0 by %c15_i32 dim 2 : vector<4x16x16xf32>, i32 -> vector<4x16x16xf32>
    %c15_i32_5 = arith.constant 15 : i32
    %3 = tpu.dynamic_rotate %1 by %c15_i32_5 dim 2 : vector<4x16x16xf32>, i32 -> vector<4x16x16xf32>
    %4 = arith.subf %0, %2 : vector<4x16x16xf32>
    %5 = math.absf %4 : vector<4x16x16xf32>
    %6 = arith.subf %1, %3 : vector<4x16x16xf32>
    %7 = math.absf %6 : vector<4x16x16xf32>
    %cst = arith.constant 0.000000e+00 : f32
    %8 = vector.broadcast %cst : f32 to vector<4x16x16xf32>
    %9 = arith.subf %8, %7 : vector<4x16x16xf32>
    %10 = math.exp %9 : vector<4x16x16xf32>
    %11 = arith.mulf %5, %10 : vector<4x16x16xf32>
    %cst_6 = arith.constant 0.000000e+00 : f32
    %12 = vector.broadcast %cst_6 : f32 to vector<4x16x16xf32>
    %13 = arith.subf %12, %5 : vector<4x16x16xf32>
    %14 = math.exp %13 : vector<4x16x16xf32>
    %15 = arith.mulf %7, %14 : vector<4x16x16xf32>
    %16 = arith.addf %11, %15 : vector<4x16x16xf32>
    %17 = tpu.iota {dimensions = array<i32: 2>} : vector<4x16x16xi32>
    %c15_i32_7 = arith.constant 15 : i32
    %18 = vector.broadcast %c15_i32_7 : i32 to vector<4x16x16xi32>
    %19 = arith.cmpi slt, %17, %18 : vector<4x16x16xi32>
    %cst_8 = arith.constant 0.000000e+00 : f32
    %20 = vector.broadcast %cst_8 : f32 to vector<4x16x16xf32>
    %21 = arith.select %19, %16, %20 : vector<4x16x16xi1>, vector<4x16x16xf32>
    %cst_9 = arith.constant dense<0.000000e+00> : vector<16x16xf32>
    %22 = vector.multi_reduction <add>, %21, %cst_9 [0] : vector<4x16x16xf32> to vector<16x16xf32>
    %cst_10 = arith.constant dense<0.000000e+00> : vector<16xf32>
    %23 = vector.multi_reduction <add>, %22, %cst_10 [0] : vector<16x16xf32> to vector<16xf32>
    %24 = vector.shape_cast %23 : vector<16xf32> to vector<1x16xf32>
    %c0_11 = arith.constant 0 : index
    %c0_12 = arith.constant 0 : index
    %c0_13 = arith.constant 0 : index
    %25 = vector.load %arg3[%c0_11, %c0_12, %c0_13] : memref<1x1x16xf32, #tpu.memory_space<vmem>>, vector<1x1x16xf32>
    %26 = vector.shape_cast %25 : vector<1x1x16xf32> to vector<1x16xf32>
    %27 = vector.shape_cast %24 : vector<1x16xf32> to vector<1x1x16xf32>
    tpu.vector_store %arg3[%c0_11, %c0_12, %c0_13], %27 {strides = array<i32>} : memref<1x1x16xf32, #tpu.memory_space<vmem>>, vector<1x1x16xf32>,
    %c15_i32_14 = arith.constant 15 : i32
    %28 = tpu.dynamic_rotate %0 by %c15_i32_14 dim 1 : vector<4x16x16xf32>, i32 -> vector<4x16x16xf32>
    %c15_i32_15 = arith.constant 15 : i32
    %29 = tpu.dynamic_rotate %1 by %c15_i32_15 dim 1 : vector<4x16x16xf32>, i32 -> vector<4x16x16xf32>
    %30 = arith.subf %0, %28 : vector<4x16x16xf32>
    %31 = math.absf %30 : vector<4x16x16xf32>
    %32 = arith.subf %1, %29 : vector<4x16x16xf32>
    %33 = math.absf %32 : vector<4x16x16xf32>
    %cst_16 = arith.constant 0.000000e+00 : f32
    %34 = vector.broadcast %cst_16 : f32 to vector<4x16x16xf32>
    %35 = arith.subf %34, %33 : vector<4x16x16xf32>
    %36 = math.exp %35 : vector<4x16x16xf32>
    %37 = arith.mulf %31, %36 : vector<4x16x16xf32>
    %cst_17 = arith.constant 0.000000e+00 : f32
    %38 = vector.broadcast %cst_17 : f32 to vector<4x16x16xf32>
    %39 = arith.subf %38, %31 : vector<4x16x16xf32>
    %40 = math.exp %39 : vector<4x16x16xf32>
    %41 = arith.mulf %33, %40 : vector<4x16x16xf32>
    %42 = arith.addf %37, %41 : vector<4x16x16xf32>
    %43 = tpu.iota {dimensions = array<i32: 1>} : vector<4x16x16xi32>
    %c15_i32_18 = arith.constant 15 : i32
    %44 = vector.broadcast %c15_i32_18 : i32 to vector<4x16x16xi32>
    %45 = arith.cmpi slt, %43, %44 : vector<4x16x16xi32>
    %cst_19 = arith.constant 0.000000e+00 : f32
    %46 = vector.broadcast %cst_19 : f32 to vector<4x16x16xf32>
    %47 = arith.select %45, %42, %46 : vector<4x16x16xi1>, vector<4x16x16xf32>
    %cst_20 = arith.constant dense<0.000000e+00> : vector<16x16xf32>
    %48 = vector.multi_reduction <add>, %47, %cst_20 [0] : vector<4x16x16xf32> to vector<16x16xf32>
    %cst_21 = arith.constant dense<0.000000e+00> : vector<16xf32>
    %49 = vector.multi_reduction <add>, %48, %cst_21 [0] : vector<16x16xf32> to vector<16xf32>
    %50 = vector.shape_cast %49 : vector<16xf32> to vector<1x16xf32>
    %c0_22 = arith.constant 0 : index
    %c0_23 = arith.constant 0 : index
    %c0_24 = arith.constant 0 : index
    %51 = vector.load %arg4[%c0_22, %c0_23, %c0_24] : memref<1x1x16xf32, #tpu.memory_space<vmem>>, vector<1x1x16xf32>
    %52 = vector.shape_cast %51 : vector<1x1x16xf32> to vector<1x16xf32>
    %53 = vector.shape_cast %50 : vector<1x16xf32> to vector<1x1x16xf32>
    tpu.vector_store %arg4[%c0_22, %c0_23, %c0_24], %53 {strides = array<i32>} : memref<1x1x16xf32, #tpu.memory_space<vmem>>, vector<1x1x16xf32>,
    return
  }
  func.func @transform_0(%arg0: i32) -> (i32, i32, i32) {
    %c0_i32 = arith.constant 0 : i32
    %c0_i32_0 = arith.constant 0 : i32
    %c0_i32_1 = arith.constant 0 : i32
    return %arg0, %c0_i32, %c0_i32_0 : i32, i32, i32
  }
  func.func @transform_1(%arg0: i32) -> (i32, i32, i32) {
    %c0_i32 = arith.constant 0 : i32
    %c0_i32_0 = arith.constant 0 : i32
    %c0_i32_1 = arith.constant 0 : i32
    return %arg0, %c0_i32, %c0_i32_0 : i32, i32, i32
  }
  func.func @transform_2(%arg0: i32) -> (i32, i32, i32) {
    %c0_i32 = arith.constant 0 : i32
    %c0_i32_0 = arith.constant 0 : i32
    %c0_i32_1 = arith.constant 0 : i32
    return %arg0, %c0_i32, %c0_i32_0 : i32, i32, i32
  }
  func.func @transform_3(%arg0: i32) -> (i32, i32, i32) {
    %c0_i32 = arith.constant 0 : i32
    %c0_i32_0 = arith.constant 0 : i32
    %c0_i32_1 = arith.constant 0 : i32
    return %arg0, %c0_i32, %c0_i32_0 : i32, i32, i32
  }
}

</mosaic_0001>

<llo_original>
// kernel: smooth_loss.1
$region0: #{smooth_loss.1}
  #allocation0 [shape = 'u32[]', space=smem, size = 0x4, offset = 0x4, fixed_abs, tag = 'smem constant byte address 0x4 - core index']
  #allocation1 [shape = 'u32[144,128]{1,0:T(1,128)}', space=vmem, size = 0x12000, scoped, tag = 'internal scratch']
  %s0 = inlined_call_operand.hbm [shape: f32[8,16,16], index: 0, kind: input, shape index: {}]
  %s1 = inlined_call_operand.hbm [shape: f32[8,16,16], index: 1, kind: input, shape index: {}]
  %s2 = inlined_call_operand.vmem [shape: f32[2,1,16], index: 2, kind: output, shape index: {0}]
  %s3 = inlined_call_operand.vmem [shape: f32[2,1,16], index: 3, kind: output, shape index: {1}]
  %4 = xla_tuple %s2, %s3
  %s5 = sld [smem:[#allocation0]]
  $region57: #{smooth_loss.1} parent=0
    _
  %s7 = ssub.s32 1, %s5
  %s8 = scalar_select 0, %s7, %s5
  $region1: #{smooth_loss.1} parent=0
    #allocation2 [shape = 'u8[65536]{0}', space=vmem, size = 0x10000, scoped, tag = 'input window, operand 0']
    #allocation3 [shape = 's32[2]{0}', space=sflag, size = 0x8, scoped, tag = 'scoped memory for smooth_loss.1']
    #allocation4 [shape = 'u8[65536]{0}', space=vmem, size = 0x10000, scoped, tag = 'input window, operand 1']
    #allocation5 [shape = 's32[2]{0}', space=sflag, size = 0x8, scoped, tag = 'scoped memory for smooth_loss.1']
    %9 = vsyncpa [#allocation3], 0
    %s10 = scalar_lea.sflag [#allocation3], 1
    %11 = vsyncpa %s10, 0
    %12 = vsyncpa [#allocation5], 0
    %s13 = scalar_lea.sflag [#allocation5], 1
    %14 = vsyncpa %s13, 0
    loop: start=0, step=1, limit=4
    $region2: #{smooth_loss.1} parent=1 // loop_pre_header
      _
    $region3: #{smooth_loss.1} parent=1 // loop_header
      %s16 = sphi 0, %s20
      %p17 = scmp.ge.s32.totalorder %s16, 4
      %s26 = sphi 0, %s28
      %s29 = sphi 0, %s26
      %s30 = sphi 0, %s29
      %s46 = sphi 0, %s30
      %s52 = sphi 0, %s54
      %s55 = sphi 0, %s52
      %s56 = sphi 0, %s55
      %s72 = sphi 0, %s56
      %s78 = sphi 0, %s80
      %s81 = sphi 0, %s78
      %s82 = sphi 0, %s81
      %s98 = sphi 0, %s82
      %s104 = sphi 0, %s106
      %s107 = sphi 0, %s104
      %s108 = sphi 0, %s107
      %s124 = sphi 0, %s108
    $region4: #{smooth_loss.1} parent=1 // loop_header_branch
      %19 = sbr.rel (%p17) target = $region8
    $region5: #{smooth_loss.1} parent=1 // loop_body
      %s21 = ssub.s32 %s16, 1
      %s22 = ssub.s32 %s16, 2
      %s23 = sadd.s32 %s16, 1
      %s24 = ssub.s32 %s16, %s23
      %p25 = scmp.eq.s32.totalorder %s24, 0
      %s27 = sadd.s32 %s26, 1
      %s28 = scalar_select %p25, %s26, %s27
      %p31 = pneg %p25
      %p32 = scmp.eq.s32.totalorder %s16, 1
      %p33 = por %p31, %p32
      %p34 = scmp.ne.s32.totalorder %s26, %s29
      %p35 = scmp.eq.s32.totalorder %s16, 0
      %p36 = por %p34, %p35
      %p37 = scmp.ne.s32.totalorder %s26, %s29
      %p38 = scmp.eq.s32.totalorder %s21, 1
      %p39 = por %p37, %p38
      %p40 = scmp.ne.s32.totalorder %s29, %s30
      %p41 = scmp.eq.s32.totalorder %s21, 0
      %p42 = por %p40, %p41
      %p43 = scmp.ne.s32.totalorder %s29, %s30
      %p44 = scmp.eq.s32.totalorder %s22, 1
      %p45 = por %p43, %p44
      %p47 = scmp.ne.s32.totalorder %s30, %s46
      %p48 = scmp.eq.s32.totalorder %s22, 0
      %p49 = por %p47, %p48
      %s50 = ssub.s32 %s16, %s23
      %p51 = scmp.eq.s32.totalorder %s50, 0
      %s53 = sadd.s32 %s52, 1
      %s54 = scalar_select %p51, %s52, %s53
      %p57 = pneg %p51
      %p58 = scmp.eq.s32.totalorder %s16, 1
      %p59 = por %p57, %p58
      %p60 = scmp.ne.s32.totalorder %s52, %s55
      %p61 = scmp.eq.s32.totalorder %s16, 0
      %p62 = por %p60, %p61
      %p63 = scmp.ne.s32.totalorder %s52, %s55
      %p64 = scmp.eq.s32.totalorder %s21, 1
      %p65 = por %p63, %p64
      %p66 = scmp.ne.s32.totalorder %s55, %s56
      %p67 = scmp.eq.s32.totalorder %s21, 0
      %p68 = por %p66, %p67
      %p69 = scmp.ne.s32.totalorder %s55, %s56
      %p70 = scmp.eq.s32.totalorder %s22, 1
      %p71 = por %p69, %p70
      %p73 = scmp.ne.s32.totalorder %s56, %s72
      %p74 = scmp.eq.s32.totalorder %s22, 0
      %p75 = por %p73, %p74
      %s76 = ssub.s32 %s16, %s23
      %p77 = scmp.eq.s32.totalorder %s76, 0
      %s79 = sadd.s32 %s78, 1
      %s80 = scalar_select %p77, %s78, %s79
      %p83 = pneg %p77
      %p84 = scmp.eq.s32.totalorder %s16, 1
      %p85 = por %p83, %p84
      %p86 = scmp.ne.s32.totalorder %s78, %s81
      %p87 = scmp.eq.s32.totalorder %s16, 0
      %p88 = por %p86, %p87
      %p89 = scmp.ne.s32.totalorder %s78, %s81
      %p90 = scmp.eq.s32.totalorder %s21, 1
      %p91 = por %p89, %p90
      %p92 = scmp.ne.s32.totalorder %s81, %s82
      %p93 = scmp.eq.s32.totalorder %s21, 0
      %p94 = por %p92, %p93
      %p95 = scmp.ne.s32.totalorder %s81, %s82
      %p96 = scmp.eq.s32.totalorder %s22, 1
      %p97 = por %p95, %p96
      %p99 = scmp.ne.s32.totalorder %s82, %s98
      %p100 = scmp.eq.s32.totalorder %s22, 0
      %p101 = por %p99, %p100
      %s102 = ssub.s32 %s16, %s23
      %p103 = scmp.eq.s32.totalorder %s102, 0
      %s105 = sadd.s32 %s104, 1
      %s106 = scalar_select %p103, %s104, %s105
      %p109 = pneg %p103
      %p110 = scmp.eq.s32.totalorder %s16, 1
      %p111 = por %p109, %p110
      %p112 = scmp.ne.s32.totalorder %s104, %s107
      %p113 = scmp.eq.s32.totalorder %s16, 0
      %p114 = por %p112, %p113
      %p115 = scmp.ne.s32.totalorder %s104, %s107
      %p116 = scmp.eq.s32.totalorder %s21, 1
      %p117 = por %p115, %p116
      %p118 = scmp.ne.s32.totalorder %s107, %s108
      %p119 = scmp.eq.s32.totalorder %s21, 0
      %p120 = por %p118, %p119
      %p121 = scmp.ne.s32.totalorder %s107, %s108
      %p122 = scmp.eq.s32.totalorder %s22, 1
      %p123 = por %p121, %p122
      %p125 = scmp.ne.s32.totalorder %s108, %s124
      %p126 = scmp.eq.s32.totalorder %s22, 0
      %p127 = por %p125, %p126
      %p128 = scmp.le.s32.totalorder 1, %s16
      %p129 = scmp.lt.s32.totalorder %s16, 3
      %p130 = pnand %p128, %p129
      %p131 = pneg %p130
      // Predicated region
      $region9: #{smooth_loss.1} parent=5 // pred_check
        _
      $region10: #{smooth_loss.1} parent=5 // pred_check_branch
        %133 = sbr.rel (%p130) target = $region12
      $region11: #{smooth_loss.1} parent=5 // pred_region
        %s134 = ssub.s32 %s16, 1
      $region12: #{smooth_loss.1} parent=5 // pred_fallthru
        _
      %p135 = scmp.lt.s32.totalorder %s16, 2
      // Predicated region
      $region13: #{smooth_loss.1} parent=5 // pred_check
        %p136 = pneg %p135
      $region14: #{smooth_loss.1} parent=5 // pred_check_branch
        %138 = sbr.rel (%p136) target = $region16
      $region15: #{smooth_loss.1} parent=5 // pred_region
        // Predicated region
        $region17: #{smooth_loss.1} parent=15 // pred_check
          %p139 = pneg %p36
        $region18: #{smooth_loss.1} parent=15 // pred_check_branch
          %141 = sbr.rel (%p139) target = $region20
        $region19: #{smooth_loss.1} parent=15 // pred_region
          %s142 = sand.u32 %s26, 1
          %s143 = scalar_lea.sflag [#allocation3], %s142
          %s144 = sand.u32 %s26, 1
          %s145 = smul.addr %s144, 64
          %s146 = scalar_lea.vmem [#allocation2], %s145
          %s147 = smul.u32 4, %s16
          %s149 = ssub.s32 1024, 1024
          %150 = vsyncadd %s143, %s149
          %s151 = smul.addr %s147, 2
          %s152 = smul.addr %s151, 128
          %s153 = scalar_lea.hbm %s0, %s152
          %s154 = sshll.u32 %s146, 4
          %s155 = int_to_ptr.vmem [resolvable:$true] %s154
          %160 = dma.hbm_to_vmem [thread:$0]  %s153, 1024, %s155, %s143, 128, 128, 8
        $region20: #{smooth_loss.1} parent=15 // pred_fallthru
          _
        // Predicated region
        $region21: #{smooth_loss.1} parent=15 // pred_check
          %p161 = pneg %p62
        $region22: #{smooth_loss.1} parent=15 // pred_check_branch
          %163 = sbr.rel (%p161) target = $region24
        $region23: #{smooth_loss.1} parent=15 // pred_region
          %s164 = sand.u32 %s52, 1
          %s165 = scalar_lea.sflag [#allocation5], %s164
          %s166 = sand.u32 %s52, 1
          %s167 = smul.addr %s166, 64
          %s168 = scalar_lea.vmem [#allocation4], %s167
          %s169 = smul.u32 4, %s16
          %s171 = ssub.s32 1024, 1024
          %172 = vsyncadd %s165, %s171
          %s173 = smul.addr %s169, 2
          %s174 = smul.addr %s173, 128
          %s175 = scalar_lea.hbm %s1, %s174
          %s176 = sshll.u32 %s168, 4
          %s177 = int_to_ptr.vmem [resolvable:$true] %s176
          %182 = dma.hbm_to_vmem [thread:$0]  %s175, 1024, %s177, %s165, 128, 128, 8
        $region24: #{smooth_loss.1} parent=15 // pred_fallthru
          _
      $region16: #{smooth_loss.1} parent=5 // pred_fallthru
        _
      %p183 = scmp.le.s32.totalorder 1, %s16
      %p184 = scmp.lt.s32.totalorder %s16, 3
      %p185 = pnand %p183, %p184
      %p186 = pneg %p185
      // Predicated region
      $region25: #{smooth_loss.1} parent=5 // pred_check
        _
      $region26: #{smooth_loss.1} parent=5 // pred_check_branch
        %188 = sbr.rel (%p185) target = $region28
      $region27: #{smooth_loss.1} parent=5 // pred_region
        %s189 = ssub.s32 %s16, 1
        %s190 = sand.u32 %s29, 1
        %s191 = scalar_lea.sflag [#allocation3], %s190
        %s192 = sand.u32 %s29, 1
        %s193 = smul.addr %s192, 64
        %s194 = scalar_lea.vmem [#allocation2], %s193
        // Predicated region
        $region29: #{smooth_loss.1} parent=27 // pred_check
          %p195 = pneg %p42
        $region30: #{smooth_loss.1} parent=27 // pred_check_branch
          %197 = sbr.rel (%p195) target = $region32
        $region31: #{smooth_loss.1} parent=27 // pred_region
          %198 = dma.done %s191, 1024
        $region32: #{smooth_loss.1} parent=27 // pred_fallthru
          _
        %s199 = sand.u32 %s55, 1
        %s200 = scalar_lea.sflag [#allocation5], %s199
        %s201 = sand.u32 %s55, 1
        %s202 = smul.addr %s201, 64
        %s203 = scalar_lea.vmem [#allocation4], %s202
        // Predicated region
        $region33: #{smooth_loss.1} parent=27 // pred_check
          %p204 = pneg %p68
        $region34: #{smooth_loss.1} parent=27 // pred_check_branch
          %206 = sbr.rel (%p204) target = $region36
        $region35: #{smooth_loss.1} parent=27 // pred_region
          %207 = dma.done %s200, 1024
        $region36: #{smooth_loss.1} parent=27 // pred_fallthru
          _
        %s208 = sand.u32 %s29, 1
        %s209 = scalar_lea.sflag [#allocation3], %s208
        %s210 = sand.u32 %s29, 1
        %s211 = smul.addr %s210, 64
        %s212 = scalar_lea.vmem [#allocation2], %s211
        %p213 = pneg %p42
        %p214 = pneg %p39
        %s215 = sand.u32 %s55, 1
        %s216 = scalar_lea.sflag [#allocation5], %s215
        %s217 = sand.u32 %s55, 1
        %s218 = smul.addr %s217, 64
        %s219 = scalar_lea.vmem [#allocation4], %s218
        %p220 = pneg %p68
        %p221 = pneg %p65
        %p222 = pneg %p94
        %p223 = pneg %p91
        %p224 = scmp.lt.s32.totalorder %s21, 1
        %s225 = scalar_select %p224, %s21, 1
        %s226 = scalar_lea.vmem %s2, %s225
        %p227 = pneg %p120
        %p228 = pneg %p117
        %p229 = scmp.lt.s32.totalorder %s21, 1
        %s230 = scalar_select %p229, %s21, 1
        %s231 = scalar_lea.vmem %s3, %s230
        %s232 = smul.u32 4, %s21
        %s233 = smul.u32 4, %s21
        %p234 = scmp.lt.s32.totalorder %s21, 1
        %s235 = scalar_select %p234, %s21, 1
        %s236 = scalar_lea.vmem %s2, %s235
        %p237 = scmp.lt.s32.totalorder %s21, 1
        %s238 = scalar_select %p237, %s21, 1
        %s239 = scalar_lea.vmem %s3, %s238
        %v240 = vld [vmem:[%s194] sm:$0xff]
        %v241 = vld [vmem:[%s194 + $0x8] sm:$0xff]
        %v242 = vld [vmem:[%s194 + $0x10] sm:$0xff]
        %v243 = vld [vmem:[%s194 + $0x18] sm:$0xff]
        %v244 = vld [vmem:[%s194 + $0x20] sm:$0xff]
        %v245 = vld [vmem:[%s194 + $0x28] sm:$0xff]
        %v246 = vld [vmem:[%s194 + $0x30] sm:$0xff]
        %v247 = vld [vmem:[%s194 + $0x38] sm:$0xff]
        %v248 = vld [vmem:[%s203] sm:$0xff]
        %v249 = vld [vmem:[%s203 + $0x8] sm:$0xff]
        %v250 = vld [vmem:[%s203 + $0x10] sm:$0xff]
        %v251 = vld [vmem:[%s203 + $0x18] sm:$0xff]
        %v252 = vld [vmem:[%s203 + $0x20] sm:$0xff]
        %v253 = vld [vmem:[%s203 + $0x28] sm:$0xff]
        %v254 = vld [vmem:[%s203 + $0x30] sm:$0xff]
        %v255 = vld [vmem:[%s203 + $0x38] sm:$0xff]
        %vm256 = vcmask 1047680
        %257 = vrot.lane.b32.xlu0 %v240, 16
        %v258 = vpop.permute.xlu0 %257
        %v259 = vsel %vm256, %v258, %v240
        %260 = vrot.lane.b32.xlu0 %v241, 16
        %v261 = vpop.permute.xlu0 %260
        %v262 = vsel %vm256, %v261, %v241
        %263 = vrot.lane.b32.xlu0 %v242, 16
        %v264 = vpop.permute.xlu0 %263
        %v265 = vsel %vm256, %v264, %v242
        %266 = vrot.lane.b32.xlu0 %v243, 16
        %v267 = vpop.permute.xlu0 %266
        %v268 = vsel %vm256, %v267, %v243
        %269 = vrot.lane.b32.xlu0 %v244, 16
        %v270 = vpop.permute.xlu0 %269
        %v271 = vsel %vm256, %v270, %v244
        %272 = vrot.lane.b32.xlu0 %v245, 16
        %v273 = vpop.permute.xlu0 %272
        %v274 = vsel %vm256, %v273, %v245
        %275 = vrot.lane.b32.xlu0 %v246, 16
        %v276 = vpop.permute.xlu0 %275
        %v277 = vsel %vm256, %v276, %v246
        %278 = vrot.lane.b32.xlu0 %v247, 16
        %v279 = vpop.permute.xlu0 %278
        %v280 = vsel %vm256, %v279, %v247
        %281 = vrot.lane.b32.xlu0 %v259, 16
        %v282 = vpop.permute.xlu0 %281
        %283 = vrot.lane.b32.xlu0 %v262, 16
        %v284 = vpop.permute.xlu0 %283
        %285 = vrot.lane.b32.xlu0 %v265, 16
        %v286 = vpop.permute.xlu0 %285
        %287 = vrot.lane.b32.xlu0 %v268, 16
        %v288 = vpop.permute.xlu0 %287
        %289 = vrot.lane.b32.xlu0 %v271, 16
        %v290 = vpop.permute.xlu0 %289
        %291 = vrot.lane.b32.xlu0 %v274, 16
        %v292 = vpop.permute.xlu0 %291
        %293 = vrot.lane.b32.xlu0 %v277, 16
        %v294 = vpop.permute.xlu0 %293
        %295 = vrot.lane.b32.xlu0 %v280, 16
        %v296 = vpop.permute.xlu0 %295
        %v297 = vsel %vm256, %v282, %v240
        %v298 = vsel %vm256, %v284, %v241
        %v299 = vsel %vm256, %v286, %v242
        %v300 = vsel %vm256, %v288, %v243
        %v301 = vsel %vm256, %v290, %v244
        %v302 = vsel %vm256, %v292, %v245
        %v303 = vsel %vm256, %v294, %v246
        %v304 = vsel %vm256, %v296, %v247
        %305 = vrot.lane.b32.xlu0 %v248, 16
        %v306 = vpop.permute.xlu0 %305
        %v307 = vsel %vm256, %v306, %v248
        %308 = vrot.lane.b32.xlu0 %v249, 16
        %v309 = vpop.permute.xlu0 %308
        %v310 = vsel %vm256, %v309, %v249
        %311 = vrot.lane.b32.xlu0 %v250, 16
        %v312 = vpop.permute.xlu0 %311
        %v313 = vsel %vm256, %v312, %v250
        %314 = vrot.lane.b32.xlu0 %v251, 16
        %v315 = vpop.permute.xlu0 %314
        %v316 = vsel %vm256, %v315, %v251
        %317 = vrot.lane.b32.xlu0 %v252, 16
        %v318 = vpop.permute.xlu0 %317
        %v319 = vsel %vm256, %v318, %v252
        %320 = vrot.lane.b32.xlu0 %v253, 16
        %v321 = vpop.permute.xlu0 %320
        %v322 = vsel %vm256, %v321, %v253
        %323 = vrot.lane.b32.xlu0 %v254, 16
        %v324 = vpop.permute.xlu0 %323
        %v325 = vsel %vm256, %v324, %v254
        %326 = vrot.lane.b32.xlu0 %v255, 16
        %v327 = vpop.permute.xlu0 %326
        %v328 = vsel %vm256, %v327, %v255
        %329 = vrot.lane.b32.xlu0 %v307, 16
        %v330 = vpop.permute.xlu0 %329
        %331 = vrot.lane.b32.xlu0 %v310, 16
        %v332 = vpop.permute.xlu0 %331
        %333 = vrot.lane.b32.xlu0 %v313, 16
        %v334 = vpop.permute.xlu0 %333
        %335 = vrot.lane.b32.xlu0 %v316, 16
        %v336 = vpop.permute.xlu0 %335
        %337 = vrot.lane.b32.xlu0 %v319, 16
        %v338 = vpop.permute.xlu0 %337
        %339 = vrot.lane.b32.xlu0 %v322, 16
        %v340 = vpop.permute.xlu0 %339
        %341 = vrot.lane.b32.xlu0 %v325, 16
        %v342 = vpop.permute.xlu0 %341
        %343 = vrot.lane.b32.xlu0 %v328, 16
        %v344 = vpop.permute.xlu0 %343
        %v345 = vsel %vm256, %v330, %v248
        %v346 = vsel %vm256, %v332, %v249
        %v347 = vsel %vm256, %v334, %v250
        %v348 = vsel %vm256, %v336, %v251
        %v349 = vsel %vm256, %v338, %v252
        %v350 = vsel %vm256, %v340, %v253
        %v351 = vsel %vm256, %v342, %v254
        %v352 = vsel %vm256, %v344, %v255
        %361 = vrot.lane.b32.xlu0 %v297, 127
        %v362 = vpop.permute.xlu0 %361
        %363 = vrot.lane.b32.xlu0 %v298, 127
        %v364 = vpop.permute.xlu0 %363
        %365 = vrot.lane.b32.xlu0 %v299, 127
        %v366 = vpop.permute.xlu0 %365
        %367 = vrot.lane.b32.xlu0 %v300, 127
        %v368 = vpop.permute.xlu0 %367
        %369 = vrot.lane.b32.xlu0 %v301, 127
        %v370 = vpop.permute.xlu0 %369
        %371 = vrot.lane.b32.xlu0 %v302, 127
        %v372 = vpop.permute.xlu0 %371
        %373 = vrot.lane.b32.xlu0 %v303, 127
        %v374 = vpop.permute.xlu0 %373
        %375 = vrot.lane.b32.xlu0 %v304, 127
        %v376 = vpop.permute.xlu0 %375
        %v385 = vsub.f32 %v240, %v362
        %v386 = vsub.f32 %v241, %v364
        %v387 = vsub.f32 %v242, %v366
        %v388 = vsub.f32 %v243, %v368
        %v389 = vsub.f32 %v244, %v370
        %v390 = vsub.f32 %v245, %v372
        %v391 = vsub.f32 %v246, %v374
        %v392 = vsub.f32 %v247, %v376
        %v393 = vand.u32 2147483647, %v385
        %v394 = vand.u32 2147483647, %v386
        %v395 = vand.u32 2147483647, %v387
        %v396 = vand.u32 2147483647, %v388
        %v397 = vand.u32 2147483647, %v389
        %v398 = vand.u32 2147483647, %v390
        %v399 = vand.u32 2147483647, %v391
        %v400 = vand.u32 2147483647, %v392
        %409 = vrot.lane.b32.xlu0 %v345, 127
        %v410 = vpop.permute.xlu0 %409
        %411 = vrot.lane.b32.xlu0 %v346, 127
        %v412 = vpop.permute.xlu0 %411
        %413 = vrot.lane.b32.xlu0 %v347, 127
        %v414 = vpop.permute.xlu0 %413
        %415 = vrot.lane.b32.xlu0 %v348, 127
        %v416 = vpop.permute.xlu0 %415
        %417 = vrot.lane.b32.xlu0 %v349, 127
        %v418 = vpop.permute.xlu0 %417
        %419 = vrot.lane.b32.xlu0 %v350, 127
        %v420 = vpop.permute.xlu0 %419
        %421 = vrot.lane.b32.xlu0 %v351, 127
        %v422 = vpop.permute.xlu0 %421
        %423 = vrot.lane.b32.xlu0 %v352, 127
        %v424 = vpop.permute.xlu0 %423
        %v433 = vsub.f32 %v248, %v410
        %v434 = vsub.f32 %v249, %v412
        %v435 = vsub.f32 %v250, %v414
        %v436 = vsub.f32 %v251, %v416
        %v437 = vsub.f32 %v252, %v418
        %v438 = vsub.f32 %v253, %v420
        %v439 = vsub.f32 %v254, %v422
        %v440 = vsub.f32 %v255, %v424
        %v441 = vand.u32 2147483647, %v433
        %v442 = vand.u32 2147483647, %v434
        %v443 = vand.u32 2147483647, %v435
        %v444 = vand.u32 2147483647, %v436
        %v445 = vand.u32 2147483647, %v437
        %v446 = vand.u32 2147483647, %v438
        %v447 = vand.u32 2147483647, %v439
        %v448 = vand.u32 2147483647, %v440
        %v449 = vsub.f32 0.0, %v441
        %v450 = vsub.f32 0.0, %v442
        %v451 = vsub.f32 0.0, %v443
        %v452 = vsub.f32 0.0, %v444
        %v453 = vsub.f32 0.0, %v445
        %v454 = vsub.f32 0.0, %v446
        %v455 = vsub.f32 0.0, %v447
        %v456 = vsub.f32 0.0, %v448
        %v457 = vmul.f32 %v449, 1.442695
        %v458 = vpow.pop %v457
        %v459 = vmul.f32 %v450, 1.442695
        %v460 = vpow.pop %v459
        %v461 = vmul.f32 %v451, 1.442695
        %v462 = vpow.pop %v461
        %v463 = vmul.f32 %v452, 1.442695
        %v464 = vpow.pop %v463
        %v465 = vmul.f32 %v453, 1.442695
        %v466 = vpow.pop %v465
        %v467 = vmul.f32 %v454, 1.442695
        %v468 = vpow.pop %v467
        %v469 = vmul.f32 %v455, 1.442695
        %v470 = vpow.pop %v469
        %v471 = vmul.f32 %v456, 1.442695
        %v472 = vpow.pop %v471
        %v473 = vmul.f32 %v393, %v458
        %v474 = vmul.f32 %v394, %v460
        %v475 = vmul.f32 %v395, %v462
        %v476 = vmul.f32 %v396, %v464
        %v477 = vmul.f32 %v397, %v466
        %v478 = vmul.f32 %v398, %v468
        %v479 = vmul.f32 %v399, %v470
        %v480 = vmul.f32 %v400, %v472
        %v481 = vsub.f32 0.0, %v393
        %v482 = vsub.f32 0.0, %v394
        %v483 = vsub.f32 0.0, %v395
        %v484 = vsub.f32 0.0, %v396
        %v485 = vsub.f32 0.0, %v397
        %v486 = vsub.f32 0.0, %v398
        %v487 = vsub.f32 0.0, %v399
        %v488 = vsub.f32 0.0, %v400
        %v489 = vmul.f32 %v481, 1.442695
        %v490 = vpow.pop %v489
        %v491 = vmul.f32 %v482, 1.442695
        %v492 = vpow.pop %v491
        %v493 = vmul.f32 %v483, 1.442695
        %v494 = vpow.pop %v493
        %v495 = vmul.f32 %v484, 1.442695
        %v496 = vpow.pop %v495
        %v497 = vmul.f32 %v485, 1.442695
        %v498 = vpow.pop %v497
        %v499 = vmul.f32 %v486, 1.442695
        %v500 = vpow.pop %v499
        %v501 = vmul.f32 %v487, 1.442695
        %v502 = vpow.pop %v501
        %v503 = vmul.f32 %v488, 1.442695
        %v504 = vpow.pop %v503
        %v505 = vmul.f32 %v441, %v490
        %v506 = vmul.f32 %v442, %v492
        %v507 = vmul.f32 %v443, %v494
        %v508 = vmul.f32 %v444, %v496
        %v509 = vmul.f32 %v445, %v498
        %v510 = vmul.f32 %v446, %v500
        %v511 = vmul.f32 %v447, %v502
        %v512 = vmul.f32 %v448, %v504
        %v513 = vadd.f32 %v473, %v505
        %v514 = vadd.f32 %v474, %v506
        %v515 = vadd.f32 %v475, %v507
        %v516 = vadd.f32 %v476, %v508
        %v517 = vadd.f32 %v477, %v509
        %v518 = vadd.f32 %v478, %v510
        %v519 = vadd.f32 %v479, %v511
        %v520 = vadd.f32 %v480, %v512
        %v521 = vlaneseq
        %v522 = vand.u32 %v521, 127
        %vm523 = vcmp.lt.s32.totalorder %v522, 15
        %v524 = vsel %vm523, %v513, 0.0
        %v525 = vsel %vm523, %v514, 0.0
        %v526 = vsel %vm523, %v515, 0.0
        %v527 = vsel %vm523, %v516, 0.0
        %v528 = vsel %vm523, %v517, 0.0
        %v529 = vsel %vm523, %v518, 0.0
        %v530 = vsel %vm523, %v519, 0.0
        %v531 = vsel %vm523, %v520, 0.0
        %vm532 = vcmask 130048
        %v533 = vsel %vm532, %v524, 0.0
        %v534 = vsel %vm532, %v526, 0.0
        %v535 = vadd.f32 %v533, %v534
        %v536 = vsel %vm532, %v528, 0.0
        %v537 = vadd.f32 %v535, %v536
        %v538 = vsel %vm532, %v530, 0.0
        %v539 = vadd.f32 %v537, %v538
        %v540 = vsel %vm532, %v525, 0.0
        %v541 = vsel %vm532, %v527, 0.0
        %v542 = vadd.f32 %v540, %v541
        %v543 = vsel %vm532, %v529, 0.0
        %v544 = vadd.f32 %v542, %v543
        %v545 = vsel %vm532, %v531, 0.0
        %v546 = vadd.f32 %v544, %v545
        %v547 = vsel %vm532, %v539, 0.0
        %v548 = vsel %vm532, %v546, 0.0
        %v549 = vadd.f32 %v547, %v548
        %v550 = vrot.slane %v549, 4
        %v551 = vadd.f32 %v549, %v550
        %v552 = vrot.slane %v551, 2
        %v553 = vadd.f32 %v551, %v552
        %v554 = vrot.slane %v553, 1
        %v555 = vadd.f32 %v553, %v554
        %vm556 = vcmask 122880
        %557 = vst.msk [vmem:[%s236] sm:$0x1] %vm556, %v555
        %v558 = vrot.slane %v240, 1
        %v559 = vrot.slane %v242, 1
        %v560 = vrot.slane %v244, 1
        %v561 = vrot.slane %v246, 1
        %v562 = vrot.slane %v241, 1
        %v563 = vrot.slane %v243, 1
        %v564 = vrot.slane %v245, 1
        %v565 = vrot.slane %v247, 1
        %v566 = vlaneseq
        %v567 = vshrl.u32 %v566, 7
        %vm568 = vcmp.lt.s32.totalorder %v567, 7
        %v569 = vsel %vm568, %v558, %v562
        %v570 = vsel %vm568, %v559, %v563
        %v571 = vsel %vm568, %v560, %v564
        %v572 = vsel %vm568, %v561, %v565
        %v573 = vsel %vm568, %v562, %v558
        %v574 = vsel %vm568, %v563, %v559
        %v575 = vsel %vm568, %v564, %v560
        %v576 = vsel %vm568, %v565, %v561
        %v577 = vrot.slane %v248, 1
        %v578 = vrot.slane %v250, 1
        %v579 = vrot.slane %v252, 1
        %v580 = vrot.slane %v254, 1
        %v581 = vrot.slane %v249, 1
        %v582 = vrot.slane %v251, 1
        %v583 = vrot.slane %v253, 1
        %v584 = vrot.slane %v255, 1
        %v585 = vsel %vm568, %v577, %v581
        %v586 = vsel %vm568, %v578, %v582
        %v587 = vsel %vm568, %v579, %v583
        %v588 = vsel %vm568, %v580, %v584
        %v589 = vsel %vm568, %v581, %v577
        %v590 = vsel %vm568, %v582, %v578
        %v591 = vsel %vm568, %v583, %v579
        %v592 = vsel %vm568, %v584, %v580
        %v593 = vsub.f32 %v240, %v569
        %v594 = vsub.f32 %v241, %v573
        %v595 = vsub.f32 %v242, %v570
        %v596 = vsub.f32 %v243, %v574
        %v597 = vsub.f32 %v244, %v571
        %v598 = vsub.f32 %v245, %v575
        %v599 = vsub.f32 %v246, %v572
        %v600 = vsub.f32 %v247, %v576
        %v601 = vand.u32 2147483647, %v593
        %v602 = vand.u32 2147483647, %v594
        %v603 = vand.u32 2147483647, %v595
        %v604 = vand.u32 2147483647, %v596
        %v605 = vand.u32 2147483647, %v597
        %v606 = vand.u32 2147483647, %v598
        %v607 = vand.u32 2147483647, %v599
        %v608 = vand.u32 2147483647, %v600
        %v609 = vsub.f32 %v248, %v585
        %v610 = vsub.f32 %v249, %v589
        %v611 = vsub.f32 %v250, %v586
        %v612 = vsub.f32 %v251, %v590
        %v613 = vsub.f32 %v252, %v587
        %v614 = vsub.f32 %v253, %v591
        %v615 = vsub.f32 %v254, %v588
        %v616 = vsub.f32 %v255, %v592
        %v617 = vand.u32 2147483647, %v609
        %v618 = vand.u32 2147483647, %v610
        %v619 = vand.u32 2147483647, %v611
        %v620 = vand.u32 2147483647, %v612
        %v621 = vand.u32 2147483647, %v613
        %v622 = vand.u32 2147483647, %v614
        %v623 = vand.u32 2147483647, %v615
        %v624 = vand.u32 2147483647, %v616
        %v625 = vsub.f32 0.0, %v617
        %v626 = vsub.f32 0.0, %v618
        %v627 = vsub.f32 0.0, %v619
        %v628 = vsub.f32 0.0, %v620
        %v629 = vsub.f32 0.0, %v621
        %v630 = vsub.f32 0.0, %v622
        %v631 = vsub.f32 0.0, %v623
        %v632 = vsub.f32 0.0, %v624
        %v633 = vmul.f32 %v625, 1.442695
        %v634 = vpow.pop %v633
        %v635 = vmul.f32 %v626, 1.442695
        %v636 = vpow.pop %v635
        %v637 = vmul.f32 %v627, 1.442695
        %v638 = vpow.pop %v637
        %v639 = vmul.f32 %v628, 1.442695
        %v640 = vpow.pop %v639
        %v641 = vmul.f32 %v629, 1.442695
        %v642 = vpow.pop %v641
        %v643 = vmul.f32 %v630, 1.442695
        %v644 = vpow.pop %v643
        %v645 = vmul.f32 %v631, 1.442695
        %v646 = vpow.pop %v645
        %v647 = vmul.f32 %v632, 1.442695
        %v648 = vpow.pop %v647
        %v649 = vmul.f32 %v601, %v634
        %v650 = vmul.f32 %v602, %v636
        %v651 = vmul.f32 %v603, %v638
        %v652 = vmul.f32 %v604, %v640
        %v653 = vmul.f32 %v605, %v642
        %v654 = vmul.f32 %v606, %v644
        %v655 = vmul.f32 %v607, %v646
        %v656 = vmul.f32 %v608, %v648
        %v657 = vsub.f32 0.0, %v601
        %v658 = vsub.f32 0.0, %v602
        %v659 = vsub.f32 0.0, %v603
        %v660 = vsub.f32 0.0, %v604
        %v661 = vsub.f32 0.0, %v605
        %v662 = vsub.f32 0.0, %v606
        %v663 = vsub.f32 0.0, %v607
        %v664 = vsub.f32 0.0, %v608
        %v665 = vmul.f32 %v657, 1.442695
        %v666 = vpow.pop %v665
        %v667 = vmul.f32 %v658, 1.442695
        %v668 = vpow.pop %v667
        %v669 = vmul.f32 %v659, 1.442695
        %v670 = vpow.pop %v669
        %v671 = vmul.f32 %v660, 1.442695
        %v672 = vpow.pop %v671
        %v673 = vmul.f32 %v661, 1.442695
        %v674 = vpow.pop %v673
        %v675 = vmul.f32 %v662, 1.442695
        %v676 = vpow.pop %v675
        %v677 = vmul.f32 %v663, 1.442695
        %v678 = vpow.pop %v677
        %v679 = vmul.f32 %v664, 1.442695
        %v680 = vpow.pop %v679
        %v681 = vmul.f32 %v617, %v666
        %v682 = vmul.f32 %v618, %v668
        %v683 = vmul.f32 %v619, %v670
        %v684 = vmul.f32 %v620, %v672
        %v685 = vmul.f32 %v621, %v674
        %v686 = vmul.f32 %v622, %v676
        %v687 = vmul.f32 %v623, %v678
        %v688 = vmul.f32 %v624, %v680
        %v689 = vadd.f32 %v649, %v681
        %v690 = vadd.f32 %v650, %v682
        %v691 = vadd.f32 %v651, %v683
        %v692 = vadd.f32 %v652, %v684
        %v693 = vadd.f32 %v653, %v685
        %v694 = vadd.f32 %v654, %v686
        %v695 = vadd.f32 %v655, %v687
        %v696 = vadd.f32 %v656, %v688
        %v697 = vadd.s32 %v567, 8
        %vm698 = vcmp.lt.s32.totalorder %v567, 15
        %vm699 = vcmp.lt.s32.totalorder %v697, 15
        %v700 = vsel %vm698, %v689, 0.0
        %v701 = vsel %vm699, %v690, 0.0
        %v702 = vsel %vm698, %v691, 0.0
        %v703 = vsel %vm699, %v692, 0.0
        %v704 = vsel %vm698, %v693, 0.0
        %v705 = vsel %vm699, %v694, 0.0
        %v706 = vsel %vm698, %v695, 0.0
        %v707 = vsel %vm699, %v696, 0.0
        %v708 = vsel %vm532, %v700, 0.0
        %v709 = vsel %vm532, %v702, 0.0
        %v710 = vadd.f32 %v708, %v709
        %v711 = vsel %vm532, %v704, 0.0
        %v712 = vadd.f32 %v710, %v711
        %v713 = vsel %vm532, %v706, 0.0
        %v714 = vadd.f32 %v712, %v713
        %v715 = vsel %vm532, %v701, 0.0
        %v716 = vsel %vm532, %v703, 0.0
        %v717 = vadd.f32 %v715, %v716
        %v718 = vsel %vm532, %v705, 0.0
        %v719 = vadd.f32 %v717, %v718
        %v720 = vsel %vm532, %v707, 0.0
        %v721 = vadd.f32 %v719, %v720
        %v722 = vsel %vm532, %v714, 0.0
        %v723 = vsel %vm532, %v721, 0.0
        %v724 = vadd.f32 %v722, %v723
        %v725 = vrot.slane %v724, 4
        %v726 = vadd.f32 %v724, %v725
        %v727 = vrot.slane %v726, 2
        %v728 = vadd.f32 %v726, %v727
        %v729 = vrot.slane %v728, 1
        %v730 = vadd.f32 %v728, %v729
        %731 = vst.msk [vmem:[%s239] sm:$0x1] %vm556, %v730
        %p732 = scmp.lt.s32.totalorder %s21, 1
        %s733 = scalar_select %p732, %s21, 1
        %s734 = scalar_lea.vmem %s2, %s733
        %p735 = scmp.lt.s32.totalorder %s21, 1
        %s736 = scalar_select %p735, %s21, 1
        %s737 = scalar_lea.vmem %s3, %s736
        // Predicated region
        $region37: #{smooth_loss.1} parent=27 // pred_check
          %p738 = pneg %p91
        $region38: #{smooth_loss.1} parent=27 // pred_check_branch
          %740 = sbr.rel (%p738) target = $region40
        $region39: #{smooth_loss.1} parent=27 // pred_region
          _
        $region40: #{smooth_loss.1} parent=27 // pred_fallthru
          _
        // Predicated region
        $region41: #{smooth_loss.1} parent=27 // pred_check
          %p741 = pneg %p117
        $region42: #{smooth_loss.1} parent=27 // pred_check_branch
          %743 = sbr.rel (%p741) target = $region44
        $region43: #{smooth_loss.1} parent=27 // pred_region
          _
        $region44: #{smooth_loss.1} parent=27 // pred_fallthru
          _
      $region28: #{smooth_loss.1} parent=5 // pred_fallthru
        _
      %p744 = scmp.le.s32.totalorder 2, %s16
      // Predicated region
      $region45: #{smooth_loss.1} parent=5 // pred_check
        %p745 = pneg %p744
      $region46: #{smooth_loss.1} parent=5 // pred_check_branch
        %747 = sbr.rel (%p745) target = $region48
      $region47: #{smooth_loss.1} parent=5 // pred_region
        %s748 = ssub.s32 %s16, 2
        // Predicated region
        $region49: #{smooth_loss.1} parent=47 // pred_check
          %p749 = pneg %p97
        $region50: #{smooth_loss.1} parent=47 // pred_check_branch
          %751 = sbr.rel (%p749) target = $region52
        $region51: #{smooth_loss.1} parent=47 // pred_region
          %p752 = scmp.lt.s32.totalorder %s22, 1
          %s753 = scalar_select %p752, %s22, 1
          %s754 = scalar_lea.vmem %s2, %s753
        $region52: #{smooth_loss.1} parent=47 // pred_fallthru
          _
        // Predicated region
        $region53: #{smooth_loss.1} parent=47 // pred_check
          %p755 = pneg %p123
        $region54: #{smooth_loss.1} parent=47 // pred_check_branch
          %757 = sbr.rel (%p755) target = $region56
        $region55: #{smooth_loss.1} parent=47 // pred_region
          %p758 = scmp.lt.s32.totalorder %s22, 1
          %s759 = scalar_select %p758, %s22, 1
          %s760 = scalar_lea.vmem %s3, %s759
        $region56: #{smooth_loss.1} parent=47 // pred_fallthru
          _
      $region48: #{smooth_loss.1} parent=5 // pred_fallthru
        _
    $region6: #{smooth_loss.1} parent=1 // loop_footer
      %s20 = sadd.s32 1, %s16
    $region7: #{smooth_loss.1} parent=1 // loop_footer_branch
      %15 = sbr.rel target = $region3
    $region8: #{smooth_loss.1} parent=1 // loop_exit
      _
    %761 = vsyncpa [#allocation3], 1
    %s762 = scalar_lea.sflag [#allocation3], 1
    %763 = vsyncpa %s762, 1
    %764 = vsyncpa [#allocation5], 1
    %s765 = scalar_lea.sflag [#allocation5], 1
    %766 = vsyncpa %s765, 1

</llo_original>
